<compile_context>
chip_gen: v7x
topology: tpu7x:2x2x1
jax: 0.10.0
libtpu: 0.0.40
codegen_flags: <defaults>
</compile_context>

<pallas_src>
import functools

import jax
import jax.numpy as jnp
from jax.experimental import pallas as pl
from jax.experimental.pallas import tpu as pltpu

_LANE = 128
_SUBLANE = 8


def _round_up(x, m):
    return ((x + m - 1) // m) * m


def decoder_kernel(z_ref, w1t_ref, b1_ref, w2t_ref, b2_ref, o_ref):
    # z_ref  : (TB, latent_p)          w1t_ref: (latent_p, hidden_p)
    # b1_ref : (1, hidden_p)           w2t_ref: (hidden_p, out_p)
    # b2_ref : (1, out_p)              o_ref  : (TB, out_p)
    z = z_ref[...]
    # First linear: z @ W1.T + b1   (MXU matmul, f32 accumulate)
    h = jnp.dot(z, w1t_ref[...], preferred_element_type=jnp.float32)
    # bias + ReLU on the VPU (kept in f32 — required on v5e, harmless elsewhere)
    h = jnp.maximum(h + b1_ref[...], 0.0)
    # Second linear: h @ W2.T + b2
    y = jnp.dot(h.astype(w2t_ref.dtype), w2t_ref[...],
                preferred_element_type=jnp.float32)
    o_ref[...] = (y + b2_ref[...]).astype(o_ref.dtype)


@functools.partial(jax.jit, static_argnames=("batch_tile",))
def decoder_forward(z, w1, b1, w2, b2, *, batch_tile=None):
    """Fused Decoder forward: ReLU(z @ W1.T + b1) @ W2.T + b2."""
    B, latent = z.shape
    hidden = w1.shape[0]
    out = w2.shape[0]

    # --- One-time layout work (outside the kernel loop) --------------------
    # Pre-transpose weights so the kernel never does an in-loop .T
    w1t = w1.T                      # (latent, hidden)
    w2t = w2.T                      # (hidden, out)

    # Pad all feature dims to the 128-lane width -> lane-dense loads/stores.
    lat_p = _round_up(latent, _LANE)
    hid_p = _round_up(hidden, _LANE)
    out_p = _round_up(out, _LANE)

    z_p = jnp.pad(z, ((0, 0), (0, lat_p - latent)))
    w1t_p = jnp.pad(w1t, ((0, lat_p - latent), (0, hid_p - hidden)))
    b1_p = jnp.pad(b1, (0, hid_p - hidden)).reshape(1, hid_p)
    w2t_p = jnp.pad(w2t, ((0, hid_p - hidden), (0, out_p - out)))
    b2_p = jnp.pad(b2, (0, out_p - out)).reshape(1, out_p)

    # --- Batch tiling -------------------------------------------------------
    # Big tiles amortize the ~0.35 us per-grid-step overhead; tiny batches
    # collapse to a single grid step (grid iterations are a serial loop).
    if batch_tile is None:
        batch_tile = min(_round_up(B, _SUBLANE), 512)
    batch_tile = max(_SUBLANE, _round_up(batch_tile, _SUBLANE))

    B_p = _round_up(B, batch_tile)
    if B_p != B:
        z_p = jnp.pad(z_p, ((0, B_p - B), (0, 0)))

    grid = (B_p // batch_tile,)

    # --- VMEM budget: raise scoped limit only if the tiles need it ---------
    itemsize = 4  # f32
    tile_bytes = 2 * batch_tile * (lat_p + out_p) * itemsize          # dbl-buffered z/out
    resident_bytes = 2 * (lat_p * hid_p + hid_p * out_p
                          + hid_p + out_p) * itemsize                 # dbl-buffered weights
    needed = tile_bytes + resident_bytes + (batch_tile * hid_p * itemsize) + (1 << 20)
    vmem_limit = None
    if needed > (32 << 20):
        vmem_limit = min(needed, 64 << 20)   # 64 MiB is physical VMEM on v7x

    compiler_params = pltpu.CompilerParams(
        dimension_semantics=("parallel",),
        vmem_limit_bytes=vmem_limit,
    )

    out_padded = pl.pallas_call(
        decoder_kernel,
        out_shape=jax.ShapeDtypeStruct((B_p, out_p), z.dtype),
        grid_spec=pltpu.PrefetchScalarGridSpec(
            num_scalar_prefetch=0,
            grid=grid,
            in_specs=[
                pl.BlockSpec((batch_tile, lat_p), lambda i: (i, 0)),   # z tile
                pl.BlockSpec((lat_p, hid_p), lambda i: (0, 0)),        # W1.T (resident)
                pl.BlockSpec((1, hid_p), lambda i: (0, 0)),            # b1
                pl.BlockSpec((hid_p, out_p), lambda i: (0, 0)),        # W2.T (resident)
                pl.BlockSpec((1, out_p), lambda i: (0, 0)),            # b2
            ],
            out_specs=pl.BlockSpec((batch_tile, out_p), lambda i: (i, 0)),
        ),
        compiler_params=compiler_params,
    )(z_p, w1t_p, b1_p, w2t_p, b2_p)

    # Strip batch / lane padding.
    return out_padded[:B, :out]


if __name__ == "__main__":
    # Small shapes consistent with the module: Decoder(latent_dim=32, out_dim=16,
    # hidden_dim=64).
    batch, latent_dim, hidden_dim, out_dim = 16, 32, 64, 16

    key = jax.random.PRNGKey(0)
    kz, kw1, kb1, kw2, kb2 = jax.random.split(key, 5)

    z = jax.random.normal(kz, (batch, latent_dim), dtype=jnp.float32)
    # Deterministic "PyTorch-style" init (uniform in +/- 1/sqrt(fan_in)).
    w1 = jax.random.uniform(kw1, (hidden_dim, latent_dim), jnp.float32,
                            -1.0 / latent_dim ** 0.5, 1.0 / latent_dim ** 0.5)
    b1 = jax.random.uniform(kb1, (hidden_dim,), jnp.float32,
                            -1.0 / latent_dim ** 0.5, 1.0 / latent_dim ** 0.5)
    w2 = jax.random.uniform(kw2, (out_dim, hidden_dim), jnp.float32,
                            -1.0 / hidden_dim ** 0.5, 1.0 / hidden_dim ** 0.5)
    b2 = jax.random.uniform(kb2, (out_dim,), jnp.float32,
                            -1.0 / hidden_dim ** 0.5, 1.0 / hidden_dim ** 0.5)

    out = decoder_forward(z, w1, b1, w2, b2)
    out = jax.block_until_ready(out)

    # Pure-JAX reference check of the fused kernel.
    ref = jnp.maximum(z @ w1.T + b1, 0.0) @ w2.T + b2
    assert out.shape == (batch, out_dim)
    assert jnp.allclose(out, ref, atol=1e-5, rtol=1e-5)

    print("KERNEL_OK")
</pallas_src>

<mosaic_0001>
module attributes {stable_mosaic.version = 11 : i64} {
  func.func @decoder_kernel(%arg0: i32, %arg1: memref<16x128xf32, #tpu.memory_space<vmem>>, %arg2: memref<128x128xf32, #tpu.memory_space<vmem>>, %arg3: memref<1x128xf32, #tpu.memory_space<vmem>>, %arg4: memref<128x128xf32, #tpu.memory_space<vmem>>, %arg5: memref<1x128xf32, #tpu.memory_space<vmem>>, %arg6: memref<16x128xf32, #tpu.memory_space<vmem>>) attributes {dimension_semantics = [#tpu.dimension_semantics<parallel>], iteration_bounds = array<i64: 1>, scalar_prefetch = 0 : i64, scratch_operands = 0 : i64, tpu.core_type = #tpu.core_type<tc>, window_params = [{transform_indices = @transform_0, window_bounds = array<i64: 16, 128>}, {pipeline_mode = #tpu.pipeline_mode<synchronous>, transform_indices = @transform_1, window_bounds = array<i64: 128, 128>}, {pipeline_mode = #tpu.pipeline_mode<synchronous>, transform_indices = @transform_2, window_bounds = array<i64: 1, 128>}, {pipeline_mode = #tpu.pipeline_mode<synchronous>, transform_indices = @transform_3, window_bounds = array<i64: 128, 128>}, {pipeline_mode = #tpu.pipeline_mode<synchronous>, transform_indices = @transform_4, window_bounds = array<i64: 1, 128>}, {transform_indices = @transform_5, window_bounds = array<i64: 16, 128>}]} {
    %c0 = arith.constant 0 : index
    %c0_0 = arith.constant 0 : index
    %0 = vector.load %arg1[%c0, %c0_0] : memref<16x128xf32, #tpu.memory_space<vmem>>, vector<16x128xf32>
    %c0_1 = arith.constant 0 : index
    %c0_2 = arith.constant 0 : index
    %1 = vector.load %arg2[%c0_1, %c0_2] : memref<128x128xf32, #tpu.memory_space<vmem>>, vector<128x128xf32>
    %cst = arith.constant dense<0.000000e+00> : vector<16x128xf32>
    %2 = tpu.matmul %0, %1, %cst {dimension_numbers = #tpu.dot_dimension_numbers<[1], [0], [0], [1], [0, 0, 1, 1], [], []>} : vector<16x128xf32>, vector<128x128xf32>, vector<16x128xf32> -> vector<16x128xf32>
    %c0_3 = arith.constant 0 : index
    %c0_4 = arith.constant 0 : index
    %3 = vector.load %arg3[%c0_3, %c0_4] : memref<1x128xf32, #tpu.memory_space<vmem>>, vector<1x128xf32>
    %4 = vector.broadcast %3 : vector<1x128xf32> to vector<16x128xf32>
    %5 = arith.addf %2, %4 : vector<16x128xf32>
    %cst_5 = arith.constant 0.000000e+00 : f32
    %6 = vector.broadcast %cst_5 : f32 to vector<16x128xf32>
    %7 = arith.maximumf %5, %6 : vector<16x128xf32>
    %c0_6 = arith.constant 0 : index
    %c0_7 = arith.constant 0 : index
    %8 = vector.load %arg4[%c0_6, %c0_7] : memref<128x128xf32, #tpu.memory_space<vmem>>, vector<128x128xf32>
    %cst_8 = arith.constant dense<0.000000e+00> : vector<16x128xf32>
    %9 = tpu.matmul %7, %8, %cst_8 {dimension_numbers = #tpu.dot_dimension_numbers<[1], [0], [0], [1], [0, 0, 1, 1], [], []>} : vector<16x128xf32>, vector<128x128xf32>, vector<16x128xf32> -> vector<16x128xf32>
    %c0_9 = arith.constant 0 : index
    %c0_10 = arith.constant 0 : index
    %10 = vector.load %arg5[%c0_9, %c0_10] : memref<1x128xf32, #tpu.memory_space<vmem>>, vector<1x128xf32>
    %11 = vector.broadcast %10 : vector<1x128xf32> to vector<16x128xf32>
    %12 = arith.addf %9, %11 : vector<16x128xf32>
    %c0_11 = arith.constant 0 : index
    %c0_12 = arith.constant 0 : index
    %13 = vector.load %arg6[%c0_11, %c0_12] : memref<16x128xf32, #tpu.memory_space<vmem>>, vector<16x128xf32>
    tpu.vector_store %arg6[%c0_11, %c0_12], %12 {strides = array<i32>} : memref<16x128xf32, #tpu.memory_space<vmem>>, vector<16x128xf32>,
    return
  }
  func.func @transform_0(%arg0: i32) -> (i32, i32) {
    %c0_i32 = arith.constant 0 : i32
    %c0_i32_0 = arith.constant 0 : i32
    return %arg0, %c0_i32 : i32, i32
  }
  func.func @transform_1(%arg0: i32) -> (i32, i32) {
    %c0_i32 = arith.constant 0 : i32
    %c0_i32_0 = arith.constant 0 : i32
    %c0_i32_1 = arith.constant 0 : i32
    return %c0_i32, %c0_i32_0 : i32, i32
  }
  func.func @transform_2(%arg0: i32) -> (i32, i32) {
    %c0_i32 = arith.constant 0 : i32
    %c0_i32_0 = arith.constant 0 : i32
    %c0_i32_1 = arith.constant 0 : i32
    return %c0_i32, %c0_i32_0 : i32, i32
  }
  func.func @transform_3(%arg0: i32) -> (i32, i32) {
    %c0_i32 = arith.constant 0 : i32
    %c0_i32_0 = arith.constant 0 : i32
    %c0_i32_1 = arith.constant 0 : i32
    return %c0_i32, %c0_i32_0 : i32, i32
  }
  func.func @transform_4(%arg0: i32) -> (i32, i32) {
    %c0_i32 = arith.constant 0 : i32
    %c0_i32_0 = arith.constant 0 : i32
    %c0_i32_1 = arith.constant 0 : i32
    return %c0_i32, %c0_i32_0 : i32, i32
  }
  func.func @transform_5(%arg0: i32) -> (i32, i32) {
    %c0_i32 = arith.constant 0 : i32
    %c0_i32_0 = arith.constant 0 : i32
    return %arg0, %c0_i32 : i32, i32
  }
}

</mosaic_0001>

<llo_original>
// kernel: decoder_forward.1
$region0: #{decoder_forward.1}
  #allocation0 [shape = 'u32[]', space=smem, size = 0x4, offset = 0x4, fixed_abs, tag = 'smem constant byte address 0x4 - core index']
  #allocation1 [shape = 'u32[144,128]{1,0:T(1,128)}', space=vmem, size = 0x12000, scoped, tag = 'internal scratch']
  %s0 = inlined_call_operand.vmem [shape: f32[16,128], index: 0, kind: input, shape index: {}]
  %s1 = inlined_call_operand.vmem [shape: f32[128,128], index: 1, kind: input, shape index: {}]
  %s2 = inlined_call_operand.vmem [shape: f32[1,128], index: 2, kind: input, shape index: {}]
  %s3 = inlined_call_operand.vmem [shape: f32[128,128], index: 3, kind: input, shape index: {}]
  %s4 = inlined_call_operand.vmem [shape: f32[1,128], index: 4, kind: input, shape index: {}]
  %s5 = inlined_call_operand.hbm [shape: f32[16,128], index: 5, kind: output, shape index: {}]
  %s6 = sld [smem:[#allocation0]]
  $region30: #{decoder_forward.1} parent=0
    _
  %s8 = ssub.s32 1, %s6
  %s9 = scalar_select 0, %s8, %s6
  $region1: #{decoder_forward.1} parent=0
    #allocation2 [shape = 'u8[8192]{0}', space=vmem, size = 0x2000, scoped, tag = 'output window, operand 0, single buffered']
    #allocation3 [shape = 's32[1]{0}', space=sflag, size = 0x4, scoped, tag = 'scoped memory for decoder_forward.1']
    %10 = vsyncpa [#allocation3], 0
    // Predicated region
    $region2: #{decoder_forward.1} parent=1 // pred_check
      _
    $region3: #{decoder_forward.1} parent=1 // pred_check_branch
      %12 = sbr.rel (0) target = $region5
    $region4: #{decoder_forward.1} parent=1 // pred_region
      _
    $region5: #{decoder_forward.1} parent=1 // pred_fallthru
      _
    // Predicated region
    $region6: #{decoder_forward.1} parent=1 // pred_check
      _
    $region7: #{decoder_forward.1} parent=1 // pred_check_branch
      %14 = sbr.rel (0) target = $region9
    $region8: #{decoder_forward.1} parent=1 // pred_region
      _
    $region9: #{decoder_forward.1} parent=1 // pred_fallthru
      _
    // Predicated region
    $region10: #{decoder_forward.1} parent=1 // pred_check
      _
    $region11: #{decoder_forward.1} parent=1 // pred_check_branch
      %16 = sbr.rel (0) target = $region13
    $region12: #{decoder_forward.1} parent=1 // pred_region
      _
    $region13: #{decoder_forward.1} parent=1 // pred_fallthru
      _
    // Predicated region
    $region14: #{decoder_forward.1} parent=1 // pred_check
      _
    $region15: #{decoder_forward.1} parent=1 // pred_check_branch
      %18 = sbr.rel (0) target = $region17
    $region16: #{decoder_forward.1} parent=1 // pred_region
      _
    $region17: #{decoder_forward.1} parent=1 // pred_fallthru
      _
    // Predicated region
    $region18: #{decoder_forward.1} parent=1 // pred_check
      _
    $region19: #{decoder_forward.1} parent=1 // pred_check_branch
      %20 = sbr.rel (0) target = $region21
    $region20: #{decoder_forward.1} parent=1 // pred_region
      _
    $region21: #{decoder_forward.1} parent=1 // pred_fallthru
      _
    %v21 = vld [vmem:[%s0] sm:$0xff]
    %v22 = vld [vmem:[%s0 + $0x8] sm:$0xff]
    %v23 = vld [vmem:[%s1] sm:$0xff]
    %v24 = vld [vmem:[%s1 + $0x8] sm:$0xff]
    %v25 = vld [vmem:[%s1 + $0x10] sm:$0xff]
    %v26 = vld [vmem:[%s1 + $0x18] sm:$0xff]
    %v27 = vld [vmem:[%s1 + $0x20] sm:$0xff]
    %v28 = vld [vmem:[%s1 + $0x28] sm:$0xff]
    %v29 = vld [vmem:[%s1 + $0x30] sm:$0xff]
    %v30 = vld [vmem:[%s1 + $0x38] sm:$0xff]
    %v31 = vld [vmem:[%s1 + $0x40] sm:$0xff]
    %v32 = vld [vmem:[%s1 + $0x48] sm:$0xff]
    %v33 = vld [vmem:[%s1 + $0x50] sm:$0xff]
    %v34 = vld [vmem:[%s1 + $0x58] sm:$0xff]
    %v35 = vld [vmem:[%s1 + $0x60] sm:$0xff]
    %v36 = vld [vmem:[%s1 + $0x68] sm:$0xff]
    %v37 = vld [vmem:[%s1 + $0x70] sm:$0xff]
    %v38 = vld [vmem:[%s1 + $0x78] sm:$0xff]
    %v39 = vld [vmem:[%s2] sm:$0x1]
    %v41 = vlaneseq
    %v42 = vshrl.u32 %v41, 7
    %v43 = vsub.s32 0, %v42
    %v44 = vrot.slane %v39, %v43
    %46 = vmatprep.subr.mxu0 0.0
    %47 = vmatpush1.msra.mxu0 %v23
    %48 = vmatprep.subr.mxu0 0.0
    %49 = vmatpush1.msra.mxu0 %v24
    %50 = vmatprep.subr.mxu0 0.0
    %51 = vmatpush1.msra.mxu0 %v25
    %52 = vmatprep.subr.mxu0 0.0
    %53 = vmatpush1.msra.mxu0 %v26
    %54 = vmatprep.subr.mxu0 0.0
    %55 = vmatpush1.msra.mxu0 %v27
    %56 = vmatprep.subr.mxu0 0.0
    %57 = vmatpush1.msra.mxu0 %v28
    %58 = vmatprep.subr.mxu0 0.0
    %59 = vmatpush1.msra.mxu0 %v29
    %60 = vmatprep.subr.mxu0 0.0
    %61 = vmatpush1.msra.mxu0 %v30
    %62 = vmatprep.subr.mxu0 0.0
    %63 = vmatpush1.msra.mxu0 %v31
    %64 = vmatprep.subr.mxu0 0.0
    %65 = vmatpush1.msra.mxu0 %v32
    %66 = vmatprep.subr.mxu0 0.0
    %67 = vmatpush1.msra.mxu0 %v33
    %68 = vmatprep.subr.mxu0 0.0
    %69 = vmatpush1.msra.mxu0 %v34
    %70 = vmatprep.subr.mxu0 0.0
    %71 = vmatpush1.msra.mxu0 %v35
    %72 = vmatprep.subr.mxu0 0.0
    %73 = vmatpush1.msra.mxu0 %v36
    %74 = vmatprep.subr.mxu0 0.0
    %75 = vmatpush1.msra.mxu0 %v37
    %76 = vmatprep.subr.mxu0 0.0
    %77 = vmatpush1.msra.mxu0 %v38
    %78 = vmatprep.subr.mxu0 0.0
    %79 = vmatpush1.msra.mxu0 0.0
    %80 = vmatprep.subr.mxu0 0.0
    %81 = vmatpush1.msra.mxu0 0.0
    %82 = vmatprep.subr.mxu0 0.0
    %83 = vmatpush1.msra.mxu0 0.0
    %84 = vmatprep.subr.mxu0 0.0
    %85 = vmatpush1.msra.mxu0 0.0
    %86 = vmatprep.subr.mxu0 0.0
    %87 = vmatpush1.msra.mxu0 0.0
    %88 = vmatprep.subr.mxu0 0.0
    %89 = vmatpush1.msra.mxu0 0.0
    %90 = vmatprep.subr.mxu0 0.0
    %91 = vmatpush1.msra.mxu0 0.0
    %92 = vmatprep.subr.mxu0 0.0
    %93 = vmatpush1.msra.mxu0 0.0
    %94 = vmatprep.subr.mxu0 0.0
    %95 = vmatpush1.msra.mxu0 0.0
    %96 = vmatprep.subr.mxu0 0.0
    %97 = vmatpush1.msra.mxu0 0.0
    %98 = vmatprep.subr.mxu0 0.0
    %99 = vmatpush1.msra.mxu0 0.0
    %100 = vmatprep.subr.mxu0 0.0
    %101 = vmatpush1.msra.mxu0 0.0
    %102 = vmatprep.subr.mxu0 0.0
    %103 = vmatpush1.msra.mxu0 0.0
    %104 = vmatprep.subr.mxu0 0.0
    %105 = vmatpush1.msra.mxu0 0.0
    %106 = vmatprep.subr.mxu0 0.0
    %107 = vmatpush1.msra.mxu0 0.0
    %108 = vmatprep.subr.mxu0 0.0
    %109 = vmatpush1.msra.mxu0 0.0
    %110 = vmatprep.mubr.f32.mxu0 0.0
    %111 = vmatmul.mubr.f32.gmra.mrb[0].mxu0 %v21
    %v112 = vpop.f32.mrb[0].mxu0
    %v113 = vadd.f32 %v44, %v112
    %v114 = vpop.f32.mrb[0].mxu0
    %115 = vmatprep.mubr.f32.mxu0 0.0
    %116 = vmatmul.mubr.f32.gmra.mrb[0].mxu0 %v22
    %v117 = vpop.f32.mrb[0].mxu0
    %v118 = vadd.f32 %v44, %v117
    %v119 = vpop.f32.mrb[0].mxu0
    %120 = vdwg.mxu0
    %v121 = vmax.f32 %v113, 0.0
    %v122 = vmax.f32 %v118, 0.0
    %v123 = vld [vmem:[%s3] sm:$0xff]
    %v124 = vld [vmem:[%s3 + $0x8] sm:$0xff]
    %v125 = vld [vmem:[%s3 + $0x10] sm:$0xff]
    %v126 = vld [vmem:[%s3 + $0x18] sm:$0xff]
    %v127 = vld [vmem:[%s3 + $0x20] sm:$0xff]
    %v128 = vld [vmem:[%s3 + $0x28] sm:$0xff]
    %v129 = vld [vmem:[%s3 + $0x30] sm:$0xff]
    %v130 = vld [vmem:[%s3 + $0x38] sm:$0xff]
    %v131 = vld [vmem:[%s3 + $0x40] sm:$0xff]
    %v132 = vld [vmem:[%s3 + $0x48] sm:$0xff]
    %v133 = vld [vmem:[%s3 + $0x50] sm:$0xff]
    %v134 = vld [vmem:[%s3 + $0x58] sm:$0xff]
    %v135 = vld [vmem:[%s3 + $0x60] sm:$0xff]
    %v136 = vld [vmem:[%s3 + $0x68] sm:$0xff]
    %v137 = vld [vmem:[%s3 + $0x70] sm:$0xff]
    %v138 = vld [vmem:[%s3 + $0x78] sm:$0xff]
    %v139 = vld [vmem:[%s4] sm:$0x1]
    %v141 = vlaneseq
    %v142 = vshrl.u32 %v141, 7
    %v143 = vsub.s32 0, %v142
    %v144 = vrot.slane %v139, %v143
    %146 = vmatprep.subr.mxu0 0.0
    %147 = vmatpush1.msra.mxu0 %v123
    %148 = vmatprep.subr.mxu0 0.0
    %149 = vmatpush1.msra.mxu0 %v124
    %150 = vmatprep.subr.mxu0 0.0
    %151 = vmatpush1.msra.mxu0 %v125
    %152 = vmatprep.subr.mxu0 0.0
    %153 = vmatpush1.msra.mxu0 %v126
    %154 = vmatprep.subr.mxu0 0.0
    %155 = vmatpush1.msra.mxu0 %v127
    %156 = vmatprep.subr.mxu0 0.0
    %157 = vmatpush1.msra.mxu0 %v128
    %158 = vmatprep.subr.mxu0 0.0
    %159 = vmatpush1.msra.mxu0 %v129
    %160 = vmatprep.subr.mxu0 0.0
    %161 = vmatpush1.msra.mxu0 %v130
    %162 = vmatprep.subr.mxu0 0.0
    %163 = vmatpush1.msra.mxu0 %v131
    %164 = vmatprep.subr.mxu0 0.0
    %165 = vmatpush1.msra.mxu0 %v132
    %166 = vmatprep.subr.mxu0 0.0
    %167 = vmatpush1.msra.mxu0 %v133
    %168 = vmatprep.subr.mxu0 0.0
    %169 = vmatpush1.msra.mxu0 %v134
    %170 = vmatprep.subr.mxu0 0.0
    %171 = vmatpush1.msra.mxu0 %v135
    %172 = vmatprep.subr.mxu0 0.0
    %173 = vmatpush1.msra.mxu0 %v136
    %174 = vmatprep.subr.mxu0 0.0
    %175 = vmatpush1.msra.mxu0 %v137
    %176 = vmatprep.subr.mxu0 0.0
    %177 = vmatpush1.msra.mxu0 %v138
    %178 = vmatprep.subr.mxu0 0.0
    %179 = vmatpush1.msra.mxu0 0.0
    %180 = vmatprep.subr.mxu0 0.0
    %181 = vmatpush1.msra.mxu0 0.0
    %182 = vmatprep.subr.mxu0 0.0
    %183 = vmatpush1.msra.mxu0 0.0
    %184 = vmatprep.subr.mxu0 0.0
    %185 = vmatpush1.msra.mxu0 0.0
    %186 = vmatprep.subr.mxu0 0.0
    %187 = vmatpush1.msra.mxu0 0.0
    %188 = vmatprep.subr.mxu0 0.0
    %189 = vmatpush1.msra.mxu0 0.0
    %190 = vmatprep.subr.mxu0 0.0
    %191 = vmatpush1.msra.mxu0 0.0
    %192 = vmatprep.subr.mxu0 0.0
    %193 = vmatpush1.msra.mxu0 0.0
    %194 = vmatprep.subr.mxu0 0.0
    %195 = vmatpush1.msra.mxu0 0.0
    %196 = vmatprep.subr.mxu0 0.0
    %197 = vmatpush1.msra.mxu0 0.0
    %198 = vmatprep.subr.mxu0 0.0
    %199 = vmatpush1.msra.mxu0 0.0
    %200 = vmatprep.subr.mxu0 0.0
    %201 = vmatpush1.msra.mxu0 0.0
    %202 = vmatprep.subr.mxu0 0.0
    %203 = vmatpush1.msra.mxu0 0.0
    %204 = vmatprep.subr.mxu0 0.0
    %205 = vmatpush1.msra.mxu0 0.0
    %206 = vmatprep.subr.mxu0 0.0
    %207 = vmatpush1.msra.mxu0 0.0
    %208 = vmatprep.subr.mxu0 0.0
    %209 = vmatpush1.msra.mxu0 0.0
    %210 = vmatprep.mubr.f32.mxu0 0.0
    %211 = vmatmul.mubr.f32.gmra.mrb[0].mxu0 %v121
    %v212 = vpop.f32.mrb[0].mxu0
    %v213 = vadd.f32 %v144, %v212
    %v214 = vpop.f32.mrb[0].mxu0
    %215 = vmatprep.mubr.f32.mxu0 0.0
    %216 = vmatmul.mubr.f32.gmra.mrb[0].mxu0 %v122
    %v217 = vpop.f32.mrb[0].mxu0
    %v218 = vadd.f32 %v144, %v217
    %v219 = vpop.f32.mrb[0].mxu0
    %220 = vdwg.mxu0
    %221 = vst [vmem:[#allocation2] sm:$0xff] %v213
    %222 = vst [vmem:[#allocation2 + $0x8] sm:$0xff] %v218
    // Predicated region
    $region22: #{decoder_forward.1} parent=1 // pred_check
      _
    $region23: #{decoder_forward.1} parent=1 // pred_check_branch
      %224 = sbr.rel (0) target = $region25
    $region24: #{decoder_forward.1} parent=1 // pred_region
      %s226 = ssub.s32 256, 256
      %227 = vsyncadd [#allocation3], %s226
      %s228 = sshll.u32 [#allocation2], 4
      %s229 = int_to_ptr.vmem [resolvable:$true] %s228
      %234 = dma.vmem_to_hbm [thread:$0]  %s229, 256, %s5, [#allocation3], 128, 128, 8
    $region25: #{decoder_forward.1} parent=1 // pred_fallthru
      _
    // Predicated region
    $region26: #{decoder_forward.1} parent=1 // pred_check
      _
    $region27: #{decoder_forward.1} parent=1 // pred_check_branch
      %236 = sbr.rel (0) target = $region29
    $region28: #{decoder_forward.1} parent=1 // pred_region
      %237 = dma.done [#allocation3], 256
    $region29: #{decoder_forward.1} parent=1 // pred_fallthru
      _
    %238 = vsyncpa [#allocation3], 1

</llo_original>
